<compile_context>
chip_gen: v6e
topology: v6e:2x2x1
jax: 0.10.0
libtpu: 0.0.40
codegen_flags: <defaults>
</compile_context>

<pallas_src>
import jax
import jax.numpy as jnp
from jax import lax
from jax.experimental import pallas as pl
from jax.experimental.pallas import tpu as pltpu


def _round_up(v, m):
    return ((v + m - 1) // m) * m


def _fcdn_kernel(x_ref, w_ref, b_ref, o_ref):
    # x_ref: (tm, d_l) VMEM   w_ref: (2, d_l) VMEM   b_ref: (2,) SMEM   o_ref: (2, tm) VMEM
    x = x_ref[...]
    w = w_ref[...]

    # z = W @ X^T : contract d_l (axis 1 of both operands). MXU, f32 accumulate.
    # Output (2, tm) is lane-dense along tm -> unmasked full-width stores.
    z = lax.dot_general(
        w, x, (((1,), (1,)), ((), ())),
        preferred_element_type=jnp.float32,
    )

    z0 = z[0:1, :] + b_ref[0]
    z1 = z[1:2, :] + b_ref[1]

    # Sigmoid activation.
    s0 = 1.0 / (1.0 + jnp.exp(-z0))
    s1 = 1.0 / (1.0 + jnp.exp(-z1))

    # Softmax over the 2 classes collapses to a single sigmoid of the difference:
    #   softmax([s0, s1])[0] = sigmoid(s0 - s1),  [1] = 1 - sigmoid(s0 - s1)
    p0 = 1.0 / (1.0 + jnp.exp(s1 - s0))
    out = jnp.concatenate([p0, 1.0 - p0], axis=0)
    o_ref[...] = out.astype(o_ref.dtype)


def fully_connected_distance_network(x, w, b, *, tm=None):
    """x: (N, d_l), w: (2, d_l), b: (2,) -> (N, 2) = softmax(sigmoid(x @ W^T + b), axis=1)."""
    n, d_l = x.shape
    itemsize = jnp.dtype(x.dtype).itemsize

    if tm is None:
        # Big row tiles (per-grid-step overhead ~0.35us), but cap so a double-buffered
        # x tile stays ~<= 8 MiB total: safe under v5e's 16 MiB scoped default and
        # v7x's 64 MiB physical / 32 MiB scoped VMEM without touching vmem_limit_bytes.
        max_tm_vmem = max(128, (4 * 1024 * 1024) // max(d_l * itemsize, 1))
        tm = min(2048, max_tm_vmem, _round_up(n, 128))
    # Lane-dense (2, tm) output blocks require tm to be a multiple of 128.
    tm = max(128, (tm // 128) * 128)

    n_pad = _round_up(n, tm)
    if n_pad != n:
        x = jnp.pad(x, ((0, n_pad - n), (0, 0)))

    y_t = pl.pallas_call(
        _fcdn_kernel,
        out_shape=jax.ShapeDtypeStruct((2, n_pad), x.dtype),
        grid_spec=pltpu.PrefetchScalarGridSpec(
            num_scalar_prefetch=0,
            grid=(n_pad // tm,),
            in_specs=[
                pl.BlockSpec((tm, d_l), lambda i: (i, 0)),            # x row tile
                pl.BlockSpec((2, d_l), lambda i: (0, 0)),             # full weight, resident
                pl.BlockSpec(memory_space=pltpu.MemorySpace.SMEM),    # bias scalars in SMEM
            ],
            out_specs=pl.BlockSpec((2, tm), lambda i: (0, i)),        # lane-dense output
        ),
        compiler_params=pltpu.CompilerParams(
            dimension_semantics=("parallel",),
        ),
    )(x, w, b)

    # Back to the PyTorch (N, 2) layout; drop padded rows.
    return y_t.T[:n, :]


if __name__ == "__main__":
    # Module hyperparams implied by forward: only d_l matters for compute.
    n_layers, d_l, n_relations = 2, 32, 3  # n_layers / n_relations unused in forward
    n = 16  # number of rows (e.g. nodes)

    key = jax.random.PRNGKey(0)
    kx, kw, kb = jax.random.split(key, 3)

    # Deterministic parameter init (PyTorch-Linear-like uniform bound 1/sqrt(d_l))
    bound = 1.0 / (d_l ** 0.5)
    w = jax.random.uniform(kw, (2, d_l), jnp.float32, -bound, bound)
    b = jax.random.uniform(kb, (2,), jnp.float32, -bound, bound)
    x = jax.random.normal(kx, (n, d_l), jnp.float32)

    out = fully_connected_distance_network(x, w, b)
    out = jax.block_until_ready(out)
    assert out.shape == (n, 2)

    # Cross-check against plain-JAX reference (exact forward of the module)
    z = x @ w.T + b
    s = jax.nn.sigmoid(z)
    ref = jax.nn.softmax(s, axis=1)
    assert jnp.allclose(out, ref, atol=1e-5, rtol=1e-5), "mismatch vs reference"

    print("KERNEL_OK")
</pallas_src>

<mosaic_0001>
module attributes {stable_mosaic.version = 11 : i64} {
  func.func @_fcdn_kernel(%arg0: i32, %arg1: memref<128x32xf32, #tpu.memory_space<vmem>>, %arg2: memref<2x32xf32, #tpu.memory_space<vmem>>, %arg3: memref<2xf32, #tpu.memory_space<smem>>, %arg4: memref<2x128xf32, #tpu.memory_space<vmem>>) attributes {dimension_semantics = [#tpu.dimension_semantics<parallel>], iteration_bounds = array<i64: 1>, scalar_prefetch = 0 : i64, scratch_operands = 0 : i64, tpu.core_type = #tpu.core_type<tc>, window_params = [{transform_indices = @transform_0, window_bounds = array<i64: 128, 32>}, {pipeline_mode = #tpu.pipeline_mode<synchronous>, transform_indices = @transform_1, window_bounds = array<i64: 2, 32>}, {transform_indices = @transform_2, window_bounds = array<i64: 2>}, {transform_indices = @transform_3, window_bounds = array<i64: 2, 128>}]} {
    %c0 = arith.constant 0 : index
    %c0_0 = arith.constant 0 : index
    %0 = vector.load %arg1[%c0, %c0_0] : memref<128x32xf32, #tpu.memory_space<vmem>>, vector<128x32xf32>
    %c0_1 = arith.constant 0 : index
    %c0_2 = arith.constant 0 : index
    %1 = vector.load %arg2[%c0_1, %c0_2] : memref<2x32xf32, #tpu.memory_space<vmem>>, vector<2x32xf32>
    %cst = arith.constant dense<0.000000e+00> : vector<2x128xf32>
    %2 = tpu.matmul %1, %0, %cst {dimension_numbers = #tpu.dot_dimension_numbers<[1], [1], [0], [0], [0, 0, 1, 0], [], []>} : vector<2x32xf32>, vector<128x32xf32>, vector<2x128xf32> -> vector<2x128xf32>
    %3 = vector.extract_strided_slice %2 {offsets = [0, 0], sizes = [1, 128], strides = [1, 1]} : vector<2x128xf32> to vector<1x128xf32>
    %c0_3 = arith.constant 0 : index
    %4 = memref.load %arg3[%c0_3] : memref<2xf32, #tpu.memory_space<smem>>
    %5 = vector.broadcast %4 : f32 to vector<1x128xf32>
    %6 = arith.addf %3, %5 : vector<1x128xf32>
    %7 = vector.extract_strided_slice %2 {offsets = [1, 0], sizes = [1, 128], strides = [1, 1]} : vector<2x128xf32> to vector<1x128xf32>
    %c1 = arith.constant 1 : index
    %8 = memref.load %arg3[%c1] : memref<2xf32, #tpu.memory_space<smem>>
    %9 = vector.broadcast %8 : f32 to vector<1x128xf32>
    %10 = arith.addf %7, %9 : vector<1x128xf32>
    %cst_4 = arith.constant 0.000000e+00 : f32
    %11 = vector.broadcast %cst_4 : f32 to vector<1x128xf32>
    %12 = arith.subf %11, %6 : vector<1x128xf32>
    %13 = math.exp %12 : vector<1x128xf32>
    %cst_5 = arith.constant 1.000000e+00 : f32
    %14 = vector.broadcast %cst_5 : f32 to vector<1x128xf32>
    %15 = arith.addf %14, %13 : vector<1x128xf32>
    %cst_6 = arith.constant 1.000000e+00 : f32
    %16 = vector.broadcast %cst_6 : f32 to vector<1x128xf32>
    %17 = arith.divf %16, %15 : vector<1x128xf32>
    %cst_7 = arith.constant 0.000000e+00 : f32
    %18 = vector.broadcast %cst_7 : f32 to vector<1x128xf32>
    %19 = arith.subf %18, %10 : vector<1x128xf32>
    %20 = math.exp %19 : vector<1x128xf32>
    %cst_8 = arith.constant 1.000000e+00 : f32
    %21 = vector.broadcast %cst_8 : f32 to vector<1x128xf32>
    %22 = arith.addf %21, %20 : vector<1x128xf32>
    %cst_9 = arith.constant 1.000000e+00 : f32
    %23 = vector.broadcast %cst_9 : f32 to vector<1x128xf32>
    %24 = arith.divf %23, %22 : vector<1x128xf32>
    %25 = arith.subf %24, %17 : vector<1x128xf32>
    %26 = math.exp %25 : vector<1x128xf32>
    %cst_10 = arith.constant 1.000000e+00 : f32
    %27 = vector.broadcast %cst_10 : f32 to vector<1x128xf32>
    %28 = arith.addf %27, %26 : vector<1x128xf32>
    %cst_11 = arith.constant 1.000000e+00 : f32
    %29 = vector.broadcast %cst_11 : f32 to vector<1x128xf32>
    %30 = arith.divf %29, %28 : vector<1x128xf32>
    %cst_12 = arith.constant 1.000000e+00 : f32
    %31 = vector.broadcast %cst_12 : f32 to vector<1x128xf32>
    %32 = arith.subf %31, %30 : vector<1x128xf32>
    %33 = tpu.concatenate %30, %32 in 0 : vector<1x128xf32>, vector<1x128xf32> -> vector<2x128xf32>
    %c0_13 = arith.constant 0 : index
    %c0_14 = arith.constant 0 : index
    %34 = vector.load %arg4[%c0_13, %c0_14] : memref<2x128xf32, #tpu.memory_space<vmem>>, vector<2x128xf32>
    tpu.vector_store %arg4[%c0_13, %c0_14], %33 {strides = array<i32>} : memref<2x128xf32, #tpu.memory_space<vmem>>, vector<2x128xf32>,
    return
  }
  func.func @transform_0(%arg0: i32) -> (i32, i32) {
    %c0_i32 = arith.constant 0 : i32
    %c0_i32_0 = arith.constant 0 : i32
    return %arg0, %c0_i32 : i32, i32
  }
  func.func @transform_1(%arg0: i32) -> (i32, i32) {
    %c0_i32 = arith.constant 0 : i32
    %c0_i32_0 = arith.constant 0 : i32
    %c0_i32_1 = arith.constant 0 : i32
    return %c0_i32, %c0_i32_0 : i32, i32
  }
  func.func @transform_2(%arg0: i32) -> i32 {
    %c0_i32 = arith.constant 0 : i32
    %c0_i32_0 = arith.constant 0 : i32
    return %c0_i32 : i32
  }
  func.func @transform_3(%arg0: i32) -> (i32, i32) {
    %c0_i32 = arith.constant 0 : i32
    %c0_i32_0 = arith.constant 0 : i32
    return %c0_i32, %arg0 : i32, i32
  }
}

</mosaic_0001>

<llo_original>
// kernel: tpu_custom_call.1
$region0: #{tpu_custom_call.1}
  #allocation0 [shape = 'u32[]', space=smem, size = 0x4, offset = 0x4, fixed_abs, tag = 'smem constant byte address 0x4 - core index']
  #allocation1 [shape = 'u32[144,128]{1,0:T(1,128)}', space=vmem, size = 0x12000, scoped, tag = 'internal scratch']
  %s0 = inlined_call_operand.vmem [shape: f32[128,32], index: 0, kind: input, shape index: {}]
  %s1 = inlined_call_operand.vmem [shape: f32[2,32], index: 1, kind: input, shape index: {}]
  %s2 = inlined_call_operand.vmem [shape: f32[2], index: 2, kind: input, shape index: {}]
  %s3 = inlined_call_operand.hbm [shape: f32[2,128], index: 3, kind: output, shape index: {}]
  %s4 = sld [smem:[#allocation0]]
  $region26: #{tpu_custom_call.1} parent=0
    _
  %s6 = ssub.s32 1, %s4
  %s7 = scalar_select 0, %s6, %s4
  $region1: #{tpu_custom_call.1} parent=0
    #allocation2 [shape = 'u8[512]{0}', space=smem, size = 0x200, scoped, tag = 'input window, operand 2, single buffered']
    #allocation3 [shape = 's32[1]{0}', space=sflag, size = 0x4, scoped, tag = 'scoped memory for tpu_custom_call.1']
    #allocation4 [shape = 's32[1]{0}', space=sflag, size = 0x4, scoped, tag = 'scoped memory for tpu_custom_call.1']
    #allocation5 [shape = 'u8[1024]{0}', space=vmem, size = 0x400, scoped, tag = 'output window, operand 0, single buffered']
    %8 = vsyncpa [#allocation4], 0
    %9 = vsyncpa [#allocation3], 0
    // Predicated region
    $region2: #{tpu_custom_call.1} parent=1 // pred_check
      _
    $region3: #{tpu_custom_call.1} parent=1 // pred_check_branch
      %11 = sbr.rel (0) target = $region5
    $region4: #{tpu_custom_call.1} parent=1 // pred_region
      _
    $region5: #{tpu_custom_call.1} parent=1 // pred_fallthru
      _
    // Predicated region
    $region6: #{tpu_custom_call.1} parent=1 // pred_check
      _
    $region7: #{tpu_custom_call.1} parent=1 // pred_check_branch
      %13 = sbr.rel (0) target = $region9
    $region8: #{tpu_custom_call.1} parent=1 // pred_region
      _
    $region9: #{tpu_custom_call.1} parent=1 // pred_fallthru
      _
    // Predicated region
    $region10: #{tpu_custom_call.1} parent=1 // pred_check
      _
    $region11: #{tpu_custom_call.1} parent=1 // pred_check_branch
      %15 = sbr.rel (0) target = $region13
    $region12: #{tpu_custom_call.1} parent=1 // pred_region
      %s17 = ssub.s32 16, 16
      %18 = vsyncadd [#allocation4], %s17
      %s20 = sshll.u32 %s2, 4
      %s21 = int_to_ptr.vmem [resolvable:$true] %s20
      %23 = dma.vmem_to_smem %s21, 16, [#allocation2], [#allocation4]
    $region13: #{tpu_custom_call.1} parent=1 // pred_fallthru
      _
    // Predicated region
    $region14: #{tpu_custom_call.1} parent=1 // pred_check
      _
    $region15: #{tpu_custom_call.1} parent=1 // pred_check_branch
      %25 = sbr.rel (0) target = $region17
    $region16: #{tpu_custom_call.1} parent=1 // pred_region
      %26 = dma.done [#allocation4], 16
    $region17: #{tpu_custom_call.1} parent=1 // pred_fallthru
      _
    %27 = sfence
    %v28 = vld [vmem:[%s0] sm:$0xff]
    %v29 = vld [vmem:[%s0 + $0x8] sm:$0xff]
    %v30 = vld [vmem:[%s0 + $0x10] sm:$0xff]
    %v31 = vld [vmem:[%s0 + $0x18] sm:$0xff]
    %v32 = vld [vmem:[%s0 + $0x20] sm:$0xff]
    %v33 = vld [vmem:[%s0 + $0x28] sm:$0xff]
    %v34 = vld [vmem:[%s0 + $0x30] sm:$0xff]
    %v35 = vld [vmem:[%s0 + $0x38] sm:$0xff]
    %v36 = vld [vmem:[%s0 + $0x40] sm:$0xff]
    %v37 = vld [vmem:[%s0 + $0x48] sm:$0xff]
    %v38 = vld [vmem:[%s0 + $0x50] sm:$0xff]
    %v39 = vld [vmem:[%s0 + $0x58] sm:$0xff]
    %v40 = vld [vmem:[%s0 + $0x60] sm:$0xff]
    %v41 = vld [vmem:[%s0 + $0x68] sm:$0xff]
    %v42 = vld [vmem:[%s0 + $0x70] sm:$0xff]
    %v43 = vld [vmem:[%s0 + $0x78] sm:$0xff]
    %v44 = vld [vmem:[%s1] sm:$0x3]
    %vm45 = vcmask 261120
    %v47 = vsel %vm45, %v44, 0
    %v50 = vsel %vm45, %v28, 0
    %v53 = vsel %vm45, %v29, 0
    %v56 = vsel %vm45, %v30, 0
    %v59 = vsel %vm45, %v31, 0
    %v62 = vsel %vm45, %v32, 0
    %v65 = vsel %vm45, %v33, 0
    %v68 = vsel %vm45, %v34, 0
    %v71 = vsel %vm45, %v35, 0
    %v74 = vsel %vm45, %v36, 0
    %v77 = vsel %vm45, %v37, 0
    %v80 = vsel %vm45, %v38, 0
    %v83 = vsel %vm45, %v39, 0
    %v86 = vsel %vm45, %v40, 0
    %v89 = vsel %vm45, %v41, 0
    %v92 = vsel %vm45, %v42, 0
    %v95 = vsel %vm45, %v43, 0
    %97 = vmatprep.subr.mxu0 0.0
    %98 = vmatpush1.xpose.msra.mxu0 %v95
    %99 = vmatprep.subr.mxu0 0.0
    %100 = vmatpush1.xpose.msra.mxu0 %v92
    %101 = vmatprep.subr.mxu0 0.0
    %102 = vmatpush1.xpose.msra.mxu0 %v89
    %103 = vmatprep.subr.mxu0 0.0
    %104 = vmatpush1.xpose.msra.mxu0 %v86
    %105 = vmatprep.subr.mxu0 0.0
    %106 = vmatpush1.xpose.msra.mxu0 %v83
    %107 = vmatprep.subr.mxu0 0.0
    %108 = vmatpush1.xpose.msra.mxu0 %v80
    %109 = vmatprep.subr.mxu0 0.0
    %110 = vmatpush1.xpose.msra.mxu0 %v77
    %111 = vmatprep.subr.mxu0 0.0
    %112 = vmatpush1.xpose.msra.mxu0 %v74
    %113 = vmatprep.subr.mxu0 0.0
    %114 = vmatpush1.xpose.msra.mxu0 %v71
    %115 = vmatprep.subr.mxu0 0.0
    %116 = vmatpush1.xpose.msra.mxu0 %v68
    %117 = vmatprep.subr.mxu0 0.0
    %118 = vmatpush1.xpose.msra.mxu0 %v65
    %119 = vmatprep.subr.mxu0 0.0
    %120 = vmatpush1.xpose.msra.mxu0 %v62
    %121 = vmatprep.subr.mxu0 0.0
    %122 = vmatpush1.xpose.msra.mxu0 %v59
    %123 = vmatprep.subr.mxu0 0.0
    %124 = vmatpush1.xpose.msra.mxu0 %v56
    %125 = vmatprep.subr.mxu0 0.0
    %126 = vmatpush1.xpose.msra.mxu0 %v53
    %127 = vmatprep.subr.mxu0 0.0
    %128 = vmatpush1.xpose.msra.mxu0 %v50
    %129 = vmatprep.subr.mxu0 0.0
    %130 = vmatpush2.xpose.msra.mxu0 0.0
    %131 = vmatprep.subr.mxu0 0.0
    %132 = vmatpush2.xpose.msra.mxu0 0.0
    %133 = vmatprep.subr.mxu0 0.0
    %134 = vmatpush2.xpose.msra.mxu0 0.0
    %135 = vmatprep.subr.mxu0 0.0
    %136 = vmatpush2.xpose.msra.mxu0 0.0
    %137 = vmatprep.subr.mxu0 0.0
    %138 = vmatpush2.xpose.msra.mxu0 0.0
    %139 = vmatprep.subr.mxu0 0.0
    %140 = vmatpush2.xpose.msra.mxu0 0.0
    %141 = vmatprep.subr.mxu0 0.0
    %142 = vmatpush2.xpose.msra.mxu0 0.0
    %143 = vmatprep.subr.mxu0 0.0
    %144 = vmatpush2.xpose.msra.mxu0 0.0
    %145 = vmatprep.subr.mxu0 0.0
    %146 = vmatpush2.xpose.msra.mxu0 0.0
    %147 = vmatprep.subr.mxu0 0.0
    %148 = vmatpush2.xpose.msra.mxu0 0.0
    %149 = vmatprep.subr.mxu0 0.0
    %150 = vmatpush2.xpose.msra.mxu0 0.0
    %151 = vmatprep.subr.mxu0 0.0
    %152 = vmatpush2.xpose.msra.mxu0 0.0
    %153 = vmatprep.subr.mxu0 0.0
    %154 = vmatpush2.xpose.msra.mxu0 0.0
    %155 = vmatprep.subr.mxu0 0.0
    %156 = vmatpush2.xpose.msra.mxu0 0.0
    %157 = vmatprep.subr.mxu0 0.0
    %158 = vmatpush2.xpose.msra.mxu0 0.0
    %159 = vmatprep.subr.mxu0 0.0
    %160 = vmatpush2.xpose.msra.mxu0 0.0
    %161 = vmatprep.mubr.f32.mxu0 0.0
    %162 = vmatmul.mubr.f32.gmra.mxu0 %v47
    %v163 = vpop.f32.mrf.mxu0
    %v164 = vadd.f32 0.0, %v163
    %v165 = vpop.f32.mrf.mxu0
    %166 = vdwg.mxu0
    %s167 = sld [smem:[#allocation2]]
    %v168 = vstv %s167
    %v169 = vadd.f32 %v164, %v168
    %s170 = sld [smem:[#allocation2 + $0x1]]
    %v171 = vstv %s170
    %v172 = vadd.f32 %v164, %v171
    %v173 = vsub.f32 0.0, %v169
    %v174 = vmul.f32 %v173, 1.442695
    %v175 = vpow.pop %v174
    %v176 = vadd.f32 %v175, 1.0
    %v177 = vrcp.pop %v176
    %v178 = vmul.f32 1.0, %v177
    %v179 = vsub.f32 0.0, %v172
    %v180 = vmul.f32 %v179, 1.442695
    %v181 = vpow.pop %v180
    %v182 = vadd.f32 %v181, 1.0
    %v183 = vrcp.pop %v182
    %v184 = vmul.f32 1.0, %v183
    %v186 = vrot.slane %v178, 7
    %v188 = vsub.f32 %v184, %v186
    %v189 = vmul.f32 %v188, 1.442695
    %v190 = vpow.pop %v189
    %v191 = vadd.f32 %v190, 1.0
    %v192 = vrcp.pop %v191
    %v193 = vmul.f32 1.0, %v192
    %v194 = vsub.f32 1.0, %v193
    %v196 = vrot.slane %v193, 1
    %vm198 = vcmask 1040384
    %v199 = vsel %vm198, %v196, %v194
    %200 = vst [vmem:[#allocation5] sm:$0x3] %v199
    // Predicated region
    $region18: #{tpu_custom_call.1} parent=1 // pred_check
      _
    $region19: #{tpu_custom_call.1} parent=1 // pred_check_branch
      %202 = sbr.rel (0) target = $region21
    $region20: #{tpu_custom_call.1} parent=1 // pred_region
      %s204 = ssub.s32 32, 32
      %205 = vsyncadd [#allocation3], %s204
      %s207 = sshll.u32 [#allocation5], 4
      %s208 = int_to_ptr.vmem [resolvable:$true] %s207
      %210 = dma.vmem_to_hbm [thread:$0]  %s208, 32, %s3, [#allocation3]
    $region21: #{tpu_custom_call.1} parent=1 // pred_fallthru
      _
    // Predicated region
    $region22: #{tpu_custom_call.1} parent=1 // pred_check
      _
    $region23: #{tpu_custom_call.1} parent=1 // pred_check_branch
      %212 = sbr.rel (0) target = $region25
    $region24: #{tpu_custom_call.1} parent=1 // pred_region
      %213 = dma.done [#allocation3], 32
    $region25: #{tpu_custom_call.1} parent=1 // pred_fallthru
      _
    %214 = vsyncpa [#allocation3], 1
    %215 = vsyncpa [#allocation4], 1

</llo_original>
